<compile_context>
chip_gen: v7x
topology: tpu7x:2x2x1
jax: 0.10.0
libtpu: 0.0.40
codegen_flags: <defaults>
</compile_context>

<pallas_src>
import jax
import jax.numpy as jnp
from jax.experimental import pallas as pl
from jax.experimental.pallas import tpu as pltpu


_SMALL_N = 1 << 16  # below ~64K elements, plain XLA fusion beats pallas_call setup cost


def _pick_tile_bytes():
    """Per-stream VMEM tile budget (f32 bytes) and explicit vmem limit per chip gen."""
    kind = ""
    try:
        kind = jax.devices()[0].device_kind.lower()
    except Exception:
        pass
    if "v7" in kind:
        # 5 streams x 2 buffers x 4 MiB = 40 MiB; v7x has 64 MiB physical VMEM.
        return 4 << 20, 48 << 20
    if "v6" in kind:
        # 5 x 2 x 2 MiB = 20 MiB; fits v6e's 32 MiB default, set explicitly anyway.
        return 2 << 20, 28 << 20
    # v5e / unknown: stay inside the 16 MiB default scoped VMEM (5 x 2 x 1 MiB = 10 MiB).
    return 1 << 20, None


def _sublane_mult(dtype):
    # Min second-to-last-dim tile multiple: 8 (32-bit), 16 (16-bit), 32 (8-bit).
    return max(8, 32 // jnp.dtype(dtype).itemsize)


def _pallas_gates(x1s, x2s, out_dtype, tile_bytes, vmem_limit):
    """Run the gate kernel on a lane-dense 2D slab (rows, width)."""
    rows, width = x1s.shape

    def kernel(x1_ref, x2_ref, a_ref, b_ref, c_ref):
        # Widen inside the kernel (VPU cast, free under the HBM roofline).
        x1 = x1_ref[...].astype(jnp.float32)
        x2 = x2_ref[...].astype(jnp.float32)
        # AND gate
        a_ref[...] = (x1 * x2).astype(a_ref.dtype)
        # OR gate -- threshold in f32 so narrow-int add semantics can't differ.
        b = jnp.where((x1 + x2) > 0.0, 1.0, 0.0)
        b_ref[...] = b.astype(b_ref.dtype)
        # NOT gate
        c_ref[...] = (1.0 - b).astype(c_ref.dtype)

    # Row-tile multiple that is legal for every dtype in flight.
    row_mult = max(_sublane_mult(x1s.dtype), _sublane_mult(x2s.dtype),
                   _sublane_mult(out_dtype))
    # Cap the per-stream tile (sized for the widest stream: f32 / out_dtype).
    widest = max(4, jnp.dtype(out_dtype).itemsize)
    tile_r_max = max(row_mult,
                     (tile_bytes // (width * widest)) // row_mult * row_mult)

    if rows <= tile_r_max:
        tile_r = rows            # single full-extent block (always layout-legal)
    else:
        tile_r = tile_r_max      # multiple of row_mult; Pallas masks partial last block
    num_blocks = pl.cdiv(rows, tile_r)

    spec = pl.BlockSpec((tile_r, width), lambda i: (i, 0))
    out_sds = jax.ShapeDtypeStruct((rows, width), out_dtype)

    n_elems = rows * width
    in_bytes = jnp.dtype(x1s.dtype).itemsize + jnp.dtype(x2s.dtype).itemsize
    out_bytes = 3 * jnp.dtype(out_dtype).itemsize
    cost = pl.CostEstimate(
        flops=3 * n_elems,
        transcendentals=0,
        bytes_accessed=n_elems * (in_bytes + out_bytes),
    )

    cp_kwargs = dict(dimension_semantics=("parallel",))
    if vmem_limit is not None:
        cp_kwargs["vmem_limit_bytes"] = int(vmem_limit)

    return pl.pallas_call(
        kernel,
        out_shape=(out_sds, out_sds, out_sds),
        grid=(num_blocks,),
        in_specs=[spec, spec],
        out_specs=(spec, spec, spec),
        compiler_params=pltpu.CompilerParams(**cp_kwargs),
        cost_estimate=cost,
    )(x1s, x2s)


def circuit_simulator(x1, x2, *, out_dtype=jnp.float32, force_pallas=False):
    """Computes (a, b, c) = (AND, OR, NOT(OR)) elementwise.

    x1, x2: arrays of identical shape (any numeric/bool dtype, e.g. NCHW).
    Returns three arrays of the same shape in `out_dtype` (default float32,
    matching the PyTorch module's .float() returns).
    """
    assert x1.shape == x2.shape
    orig_shape = x1.shape
    # bool has an awkward VMEM layout; int8 is byte-identical and cheap.
    if x1.dtype == jnp.bool_:
        x1 = x1.astype(jnp.int8)
    if x2.dtype == jnp.bool_:
        x2 = x2.astype(jnp.int8)
    n = x1.size

    def jnp_gates(a1, a2):
        a1f = a1.astype(jnp.float32)
        a2f = a2.astype(jnp.float32)
        a = (a1f * a2f).astype(out_dtype)
        b_f32 = ((a1f + a2f) > 0).astype(jnp.float32)
        b = b_f32.astype(out_dtype)
        c = (1.0 - b_f32).astype(out_dtype)
        return a, b, c

    # Small-input fast path: plain XLA fusion wins below a few hundred KiB.
    if n == 0 or (not force_pallas and n < _SMALL_N):
        return jnp_gates(x1, x2)

    tile_bytes, vmem_limit = _pick_tile_bytes()

    # Pick the widest lane-dense width that divides n -> pure reshape, no copy.
    width = None
    for w in (4096, 2048, 1024, 512, 256, 128):
        if n % w == 0:
            width = w
            break

    if width is not None:
        rows = n // width
        a, b, c = _pallas_gates(x1.reshape(rows, width), x2.reshape(rows, width),
                                out_dtype, tile_bytes, vmem_limit)
        return (a.reshape(orig_shape), b.reshape(orig_shape), c.reshape(orig_shape))

    # Non-divisible fallback: Pallas over the 128-divisible bulk, plain jnp over
    # the <128-element tail. No full-array pad copy.
    width = 128
    bulk = (n // width) * width
    x1f = x1.reshape(-1)
    x2f = x2.reshape(-1)
    if bulk == 0:
        return jnp_gates(x1, x2)
    rows = bulk // width
    ab, bb, cb = _pallas_gates(x1f[:bulk].reshape(rows, width),
                               x2f[:bulk].reshape(rows, width),
                               out_dtype, tile_bytes, vmem_limit)
    at, bt, ct = jnp_gates(x1f[bulk:], x2f[bulk:])
    a = jnp.concatenate([ab.reshape(-1), at]).reshape(orig_shape)
    b = jnp.concatenate([bb.reshape(-1), bt]).reshape(orig_shape)
    c = jnp.concatenate([cb.reshape(-1), ct]).reshape(orig_shape)
    return a, b, c


if __name__ == "__main__":
    key = jax.random.PRNGKey(0)
    k1, k2 = jax.random.split(key)

    # Small NCHW-shaped binary inputs (as a logic circuit would see).
    shape = (2, 4, 16, 16)
    x1 = jax.random.bernoulli(k1, 0.5, shape).astype(jnp.float32)
    x2 = jax.random.bernoulli(k2, 0.5, shape).astype(jnp.float32)

    # Force the Pallas path at this small demo shape (the public API would
    # otherwise take the plain-XLA small-input fast path).
    a, b, c = circuit_simulator(x1, x2, force_pallas=True)
    jax.block_until_ready((a, b, c))

    a_ref = x1 * x2
    b_ref = ((x1 + x2) > 0).astype(jnp.float32)
    c_ref = 1.0 - b_ref
    assert a.shape == shape and b.shape == shape and c.shape == shape
    assert a.dtype == jnp.float32 and b.dtype == jnp.float32 and c.dtype == jnp.float32
    assert jnp.allclose(a, a_ref)
    assert jnp.allclose(b, b_ref)
    assert jnp.allclose(c, c_ref)

    # Also exercise narrow (bf16) inputs and the non-128-divisible bulk+tail path.
    shape2 = (3, 5, 7, 11)  # 1155 elements, not a multiple of 128
    y1 = jax.random.bernoulli(k1, 0.5, shape2).astype(jnp.bfloat16)
    y2 = jax.random.bernoulli(k2, 0.5, shape2).astype(jnp.bfloat16)
    a2, b2, c2 = circuit_simulator(y1, y2, force_pallas=True)
    jax.block_until_ready((a2, b2, c2))

    y1f = y1.astype(jnp.float32)
    y2f = y2.astype(jnp.float32)
    b2_ref = ((y1f + y2f) > 0).astype(jnp.float32)
    assert jnp.allclose(a2, y1f * y2f)
    assert jnp.allclose(b2, b2_ref)
    assert jnp.allclose(c2, 1.0 - b2_ref)

    print("KERNEL_OK")
</pallas_src>

<mosaic_0001>
module attributes {stable_mosaic.version = 11 : i64} {
  func.func @kernel(%arg0: i32, %arg1: memref<1x2048xf32, #tpu.memory_space<vmem>>, %arg2: memref<1x2048xf32, #tpu.memory_space<vmem>>, %arg3: memref<1x2048xf32, #tpu.memory_space<vmem>>, %arg4: memref<1x2048xf32, #tpu.memory_space<vmem>>, %arg5: memref<1x2048xf32, #tpu.memory_space<vmem>>) attributes {dimension_semantics = [#tpu.dimension_semantics<parallel>], iteration_bounds = array<i64: 1>, scalar_prefetch = 0 : i64, scratch_operands = 0 : i64, tpu.core_type = #tpu.core_type<tc>, window_params = [{transform_indices = @transform_0, window_bounds = array<i64: 1, 2048>}, {transform_indices = @transform_1, window_bounds = array<i64: 1, 2048>}, {transform_indices = @transform_2, window_bounds = array<i64: 1, 2048>}, {transform_indices = @transform_3, window_bounds = array<i64: 1, 2048>}, {transform_indices = @transform_4, window_bounds = array<i64: 1, 2048>}]} {
    %c0 = arith.constant 0 : index
    %c0_0 = arith.constant 0 : index
    %0 = vector.load %arg1[%c0, %c0_0] : memref<1x2048xf32, #tpu.memory_space<vmem>>, vector<1x2048xf32>
    %c0_1 = arith.constant 0 : index
    %c0_2 = arith.constant 0 : index
    %1 = vector.load %arg2[%c0_1, %c0_2] : memref<1x2048xf32, #tpu.memory_space<vmem>>, vector<1x2048xf32>
    %2 = arith.mulf %0, %1 : vector<1x2048xf32>
    %c0_3 = arith.constant 0 : index
    %c0_4 = arith.constant 0 : index
    %3 = vector.load %arg3[%c0_3, %c0_4] : memref<1x2048xf32, #tpu.memory_space<vmem>>, vector<1x2048xf32>
    tpu.vector_store %arg3[%c0_3, %c0_4], %2 {strides = array<i32>} : memref<1x2048xf32, #tpu.memory_space<vmem>>, vector<1x2048xf32>,
    %4 = arith.addf %0, %1 : vector<1x2048xf32>
    %cst = arith.constant 0.000000e+00 : f32
    %5 = vector.broadcast %cst : f32 to vector<1x2048xf32>
    %6 = arith.cmpf ogt, %4, %5 : vector<1x2048xf32>
    %cst_5 = arith.constant 1.000000e+00 : f32
    %cst_6 = arith.constant 0.000000e+00 : f32
    %7 = vector.broadcast %cst_5 : f32 to vector<1x2048xf32>
    %8 = vector.broadcast %cst_6 : f32 to vector<1x2048xf32>
    %9 = arith.select %6, %7, %8 : vector<1x2048xi1>, vector<1x2048xf32>
    %c0_7 = arith.constant 0 : index
    %c0_8 = arith.constant 0 : index
    %10 = vector.load %arg4[%c0_7, %c0_8] : memref<1x2048xf32, #tpu.memory_space<vmem>>, vector<1x2048xf32>
    tpu.vector_store %arg4[%c0_7, %c0_8], %9 {strides = array<i32>} : memref<1x2048xf32, #tpu.memory_space<vmem>>, vector<1x2048xf32>,
    %cst_9 = arith.constant 1.000000e+00 : f32
    %11 = vector.broadcast %cst_9 : f32 to vector<1x2048xf32>
    %12 = arith.subf %11, %9 : vector<1x2048xf32>
    %c0_10 = arith.constant 0 : index
    %c0_11 = arith.constant 0 : index
    %13 = vector.load %arg5[%c0_10, %c0_11] : memref<1x2048xf32, #tpu.memory_space<vmem>>, vector<1x2048xf32>
    tpu.vector_store %arg5[%c0_10, %c0_11], %12 {strides = array<i32>} : memref<1x2048xf32, #tpu.memory_space<vmem>>, vector<1x2048xf32>,
    return
  }
  func.func @transform_0(%arg0: i32) -> (i32, i32) {
    %c0_i32 = arith.constant 0 : i32
    %c0_i32_0 = arith.constant 0 : i32
    return %arg0, %c0_i32 : i32, i32
  }
  func.func @transform_1(%arg0: i32) -> (i32, i32) {
    %c0_i32 = arith.constant 0 : i32
    %c0_i32_0 = arith.constant 0 : i32
    return %arg0, %c0_i32 : i32, i32
  }
  func.func @transform_2(%arg0: i32) -> (i32, i32) {
    %c0_i32 = arith.constant 0 : i32
    %c0_i32_0 = arith.constant 0 : i32
    return %arg0, %c0_i32 : i32, i32
  }
  func.func @transform_3(%arg0: i32) -> (i32, i32) {
    %c0_i32 = arith.constant 0 : i32
    %c0_i32_0 = arith.constant 0 : i32
    return %arg0, %c0_i32 : i32, i32
  }
  func.func @transform_4(%arg0: i32) -> (i32, i32) {
    %c0_i32 = arith.constant 0 : i32
    %c0_i32_0 = arith.constant 0 : i32
    return %arg0, %c0_i32 : i32, i32
  }
}

</mosaic_0001>

<llo_original>
// kernel: tpu_custom_call.1
$region0: #{tpu_custom_call.1}
  #allocation0 [shape = 'u32[]', space=smem, size = 0x4, offset = 0x4, fixed_abs, tag = 'smem constant byte address 0x4 - core index']
  #allocation1 [shape = 'u32[144,128]{1,0:T(1,128)}', space=vmem, size = 0x12000, scoped, tag = 'internal scratch']
  %s0 = inlined_call_operand.hbm [shape: f32[1,2048], index: 0, kind: input, shape index: {}]
  %s1 = inlined_call_operand.hbm [shape: f32[1,2048], index: 1, kind: input, shape index: {}]
  %s2 = inlined_call_operand.hbm [shape: f32[1,2048], index: 2, kind: output, shape index: {0}]
  %s3 = inlined_call_operand.hbm [shape: f32[1,2048], index: 3, kind: output, shape index: {1}]
  %s4 = inlined_call_operand.hbm [shape: f32[1,2048], index: 4, kind: output, shape index: {2}]
  %5 = xla_tuple %s2, %s3, %s4
  %s6 = sld [smem:[#allocation0]]
  $region42: #{tpu_custom_call.1} parent=0
    _
  %s8 = ssub.s32 1, %s6
  %s9 = scalar_select 0, %s8, %s6
  $region1: #{tpu_custom_call.1} parent=0
    #allocation2 [shape = 'u8[8192]{0}', space=vmem, size = 0x2000, scoped, tag = 'input window, operand 0, single buffered']
    #allocation3 [shape = 's32[1]{0}', space=sflag, size = 0x4, scoped, tag = 'scoped memory for tpu_custom_call.1']
    #allocation4 [shape = 's32[1]{0}', space=sflag, size = 0x4, scoped, tag = 'scoped memory for tpu_custom_call.1']
    #allocation5 [shape = 'u8[8192]{0}', space=vmem, size = 0x2000, scoped, tag = 'input window, operand 1, single buffered']
    #allocation6 [shape = 's32[1]{0}', space=sflag, size = 0x4, scoped, tag = 'scoped memory for tpu_custom_call.1']
    #allocation7 [shape = 'u8[8192]{0}', space=vmem, size = 0x2000, scoped, tag = 'output window, operand 0, single buffered']
    #allocation8 [shape = 'u8[8192]{0}', space=vmem, size = 0x2000, scoped, tag = 'output window, operand 1, single buffered']
    #allocation9 [shape = 's32[1]{0}', space=sflag, size = 0x4, scoped, tag = 'scoped memory for tpu_custom_call.1']
    #allocation10 [shape = 'u8[8192]{0}', space=vmem, size = 0x2000, scoped, tag = 'output window, operand 2, single buffered']
    %10 = vsyncpa [#allocation3], 0
    %11 = vsyncpa [#allocation6], 0
    %12 = vsyncpa [#allocation4], 0
    %13 = vsyncpa [#allocation9], 0
    // Predicated region
    $region2: #{tpu_custom_call.1} parent=1 // pred_check
      _
    $region3: #{tpu_custom_call.1} parent=1 // pred_check_branch
      %15 = sbr.rel (0) target = $region5
    $region4: #{tpu_custom_call.1} parent=1 // pred_region
      %s17 = ssub.s32 256, 256
      %18 = vsyncadd [#allocation3], %s17
      %s20 = sshll.u32 [#allocation2], 4
      %s21 = int_to_ptr.vmem [resolvable:$true] %s20
      %23 = dma.hbm_to_vmem [thread:$0]  %s0, 256, %s21, [#allocation3]
    $region5: #{tpu_custom_call.1} parent=1 // pred_fallthru
      _
    // Predicated region
    $region6: #{tpu_custom_call.1} parent=1 // pred_check
      _
    $region7: #{tpu_custom_call.1} parent=1 // pred_check_branch
      %25 = sbr.rel (0) target = $region9
    $region8: #{tpu_custom_call.1} parent=1 // pred_region
      %s27 = ssub.s32 256, 256
      %28 = vsyncadd [#allocation6], %s27
      %s30 = sshll.u32 [#allocation5], 4
      %s31 = int_to_ptr.vmem [resolvable:$true] %s30
      %33 = dma.hbm_to_vmem [thread:$0]  %s1, 256, %s31, [#allocation6]
    $region9: #{tpu_custom_call.1} parent=1 // pred_fallthru
      _
    // Predicated region
    $region10: #{tpu_custom_call.1} parent=1 // pred_check
      _
    $region11: #{tpu_custom_call.1} parent=1 // pred_check_branch
      %35 = sbr.rel (0) target = $region13
    $region12: #{tpu_custom_call.1} parent=1 // pred_region
      %36 = dma.done [#allocation3], 256
    $region13: #{tpu_custom_call.1} parent=1 // pred_fallthru
      _
    // Predicated region
    $region14: #{tpu_custom_call.1} parent=1 // pred_check
      _
    $region15: #{tpu_custom_call.1} parent=1 // pred_check_branch
      %38 = sbr.rel (0) target = $region17
    $region16: #{tpu_custom_call.1} parent=1 // pred_region
      %39 = dma.done [#allocation6], 256
    $region17: #{tpu_custom_call.1} parent=1 // pred_fallthru
      _
    %v40 = vld [vmem:[#allocation2] sm:$0xff]
    %v41 = vld [vmem:[#allocation2 + $0x8] sm:$0xff]
    %v42 = vld [vmem:[#allocation5] sm:$0xff]
    %v43 = vld [vmem:[#allocation5 + $0x8] sm:$0xff]
    %v44 = vmul.f32 %v40, %v42
    %v45 = vmul.f32 %v41, %v43
    %46 = vst [vmem:[#allocation7] sm:$0xff] %v44
    %47 = vst [vmem:[#allocation7 + $0x8] sm:$0xff] %v45
    %v48 = vadd.f32 %v40, %v42
    %v49 = vadd.f32 %v41, %v43
    %vm50 = vcmp.gt.f32.partialorder %v48, 0.0
    %vm51 = vcmp.gt.f32.partialorder %v49, 0.0
    %v52 = vsel %vm50, 1.0, 0.0
    %v53 = vsel %vm51, 1.0, 0.0
    %54 = vst [vmem:[#allocation8] sm:$0xff] %v52
    %55 = vst [vmem:[#allocation8 + $0x8] sm:$0xff] %v53
    %v56 = vsub.f32 1.0, %v52
    %v57 = vsub.f32 1.0, %v53
    %58 = vst [vmem:[#allocation10] sm:$0xff] %v56
    %59 = vst [vmem:[#allocation10 + $0x8] sm:$0xff] %v57
    // Predicated region
    $region18: #{tpu_custom_call.1} parent=1 // pred_check
      _
    $region19: #{tpu_custom_call.1} parent=1 // pred_check_branch
      %61 = sbr.rel (0) target = $region21
    $region20: #{tpu_custom_call.1} parent=1 // pred_region
      %s63 = ssub.s32 256, 256
      %64 = vsyncadd [#allocation4], %s63
      %s66 = sshll.u32 [#allocation7], 4
      %s67 = int_to_ptr.vmem [resolvable:$true] %s66
      %69 = dma.vmem_to_hbm [thread:$0]  %s67, 256, %s2, [#allocation4]
    $region21: #{tpu_custom_call.1} parent=1 // pred_fallthru
      _
    // Predicated region
    $region22: #{tpu_custom_call.1} parent=1 // pred_check
      _
    $region23: #{tpu_custom_call.1} parent=1 // pred_check_branch
      %71 = sbr.rel (0) target = $region25
    $region24: #{tpu_custom_call.1} parent=1 // pred_region
      %s73 = ssub.s32 256, 256
      %74 = vsyncadd [#allocation9], %s73
      %s76 = sshll.u32 [#allocation8], 4
      %s77 = int_to_ptr.vmem [resolvable:$true] %s76
      %79 = dma.vmem_to_hbm [thread:$0]  %s77, 256, %s3, [#allocation9]
    $region25: #{tpu_custom_call.1} parent=1 // pred_fallthru
      _
    // Predicated region
    $region26: #{tpu_custom_call.1} parent=1 // pred_check
      _
    $region27: #{tpu_custom_call.1} parent=1 // pred_check_branch
      %81 = sbr.rel (0) target = $region29
    $region28: #{tpu_custom_call.1} parent=1 // pred_region
      %s83 = ssub.s32 256, 256
      %84 = vsyncadd [#allocation9], %s83
      %s86 = sshll.u32 [#allocation10], 4
      %s87 = int_to_ptr.vmem [resolvable:$true] %s86
      %89 = dma.vmem_to_hbm [thread:$0]  %s87, 256, %s4, [#allocation9]
    $region29: #{tpu_custom_call.1} parent=1 // pred_fallthru
      _
    // Predicated region
    $region30: #{tpu_custom_call.1} parent=1 // pred_check
      _
    $region31: #{tpu_custom_call.1} parent=1 // pred_check_branch
      %91 = sbr.rel (0) target = $region33
    $region32: #{tpu_custom_call.1} parent=1 // pred_region
      %92 = dma.done [#allocation4], 256
    $region33: #{tpu_custom_call.1} parent=1 // pred_fallthru
      _
    // Predicated region
    $region34: #{tpu_custom_call.1} parent=1 // pred_check
      _
    $region35: #{tpu_custom_call.1} parent=1 // pred_check_branch
      %94 = sbr.rel (0) target = $region37
    $region36: #{tpu_custom_call.1} parent=1 // pred_region
      %95 = dma.done [#allocation9], 256
    $region37: #{tpu_custom_call.1} parent=1 // pred_fallthru
      _
    // Predicated region
    $region38: #{tpu_custom_call.1} parent=1 // pred_check
      _
    $region39: #{tpu_custom_call.1} parent=1 // pred_check_branch
      %97 = sbr.rel (0) target = $region41
    $region40: #{tpu_custom_call.1} parent=1 // pred_region
      %98 = dma.done [#allocation9], 256
    $region41: #{tpu_custom_call.1} parent=1 // pred_fallthru
      _
    %99 = vsyncpa [#allocation3], 1
    %100 = vsyncpa [#allocation6], 1
    %101 = vsyncpa [#allocation4], 1
    %102 = vsyncpa [#allocation9], 1

</llo_original>
